<compile_context>
chip_gen: v7x
topology: tpu7x:2x2x1
jax: 0.10.0
libtpu: 0.0.40
codegen_flags: <defaults>
</compile_context>

<pallas_src>
import functools

import jax
import jax.numpy as jnp
from jax import lax
from jax.experimental import pallas as pl
from jax.experimental.pallas import tpu as pltpu

LN_EPS = 1e-5        # torch.nn.LayerNorm default eps
NEG_SLOPE = 0.2      # GATConv default negative_slope
MASK_VAL = -1e30     # additive softmax mask for missing edges
LANE = 128


# ----------------------------- small helpers ---------------------------------

def _pad_to(n, m=LANE):
    return ((n + m - 1) // m) * m


def _pick_tm(n):
    for t in (512, 256, 128, 64, 32, 16):
        if t <= n and n % t == 0:
            return t
    return n


def _mm(a, b, contract=(1, 0)):
    """bf16 MXU matmul with f32 accumulation."""
    return lax.dot_general(
        a.astype(jnp.bfloat16), b.astype(jnp.bfloat16),
        (((contract[0],), (contract[1],)), ((), ())),
        preferred_element_type=jnp.float32)


def _layernorm_masked(x, g, b, mask, d):
    """LayerNorm over the first `d` (real) features of a 128-padded dim.
    Padded entries of x are zero by construction; g/b are zero-padded."""
    mu = jnp.sum(x, axis=-1, keepdims=True) * (1.0 / d)
    xc = (x - mu) * mask
    var = jnp.sum(xc * xc, axis=-1, keepdims=True) * (1.0 / d)
    return xc * lax.rsqrt(var + LN_EPS) * g + b


def _layernorm(x, g, b):
    mu = jnp.mean(x, axis=-1, keepdims=True)
    var = jnp.mean((x - mu) ** 2, axis=-1, keepdims=True)
    return (x - mu) * lax.rsqrt(var + LN_EPS) * g + b


def _row_spec(tm, cols):
    return pl.BlockSpec((tm, cols), lambda i: (i, 0))


def _resident(shape):
    nd = len(shape)
    return pl.BlockSpec(shape, lambda i: (0,) * nd)


def _cparams(sem):
    # TODO(synk): raise toward 96 MiB on v5e/v6e; keep <= ~48 MiB on v7x.
    return pltpu.CompilerParams(dimension_semantics=(sem,),
                                vmem_limit_bytes=48 << 20)


# ----------------------------- generic linear (lin_in / heads) ---------------

def _linear_kernel(x_ref, w_ref, b_ref, o_ref):
    o_ref[...] = _mm(x_ref[...], w_ref[...]) + b_ref[...]


def _linear(x, w, b, tm):
    n, kin = x.shape
    m = w.shape[1]
    return pl.pallas_call(
        _linear_kernel,
        out_shape=jax.ShapeDtypeStruct((n, m), jnp.float32),
        grid=(n // tm,),
        in_specs=[_row_spec(tm, kin), _resident(w.shape), _resident(b.shape)],
        out_specs=_row_spec(tm, m),
        compiler_params=_cparams("parallel"),
    )(x, w, b)


# ----------------------------- local layer: projection pass ------------------

def _local_proj_kernel(x_ref, fw_ref, fb_ref, attd_ref,
                       xs_ref, h_ref, lin_ref, ad_ref, *, dp):
    y = _mm(x_ref[...], fw_ref[...]) + fb_ref[...]        # [TM, 3*Dp] = [h|gat|lin]
    xs = y[:, dp:2 * dp]
    xs_ref[...] = xs.astype(jnp.bfloat16)
    h_ref[...] = jnp.maximum(y[:, :dp], 0.0)              # relu(h)
    lin_ref[...] = y[:, 2 * dp:]
    ad_ref[...] = _mm(xs, attd_ref[...])                  # dst scores, MXU [TM,1]


def _local_proj(x, fw, fb, att_dst_col, *, tm, dp):
    n = x.shape[0]
    out_shape = (jax.ShapeDtypeStruct((n, dp), jnp.bfloat16),  # xs (feeds MXU)
                 jax.ShapeDtypeStruct((n, dp), jnp.float32),   # relu(h)
                 jax.ShapeDtypeStruct((n, dp), jnp.float32),   # lin
                 jax.ShapeDtypeStruct((n, 1), jnp.float32))    # a_dst
    return pl.pallas_call(
        functools.partial(_local_proj_kernel, dp=dp),
        out_shape=out_shape,
        grid=(n // tm,),
        in_specs=[_row_spec(tm, dp), _resident(fw.shape), _resident(fb.shape),
                  _resident(att_dst_col.shape)],
        out_specs=(_row_spec(tm, dp), _row_spec(tm, dp), _row_spec(tm, dp),
                   _row_spec(tm, 1)),
        compiler_params=_cparams("parallel"),
    )(x, fw, fb, att_dst_col)


# ----------------------------- local layer: attention pass -------------------

def _local_attn_kernel(bias_ref, dmask_ref, ad_ref, h_ref, lin_ref, xloc_ref,
                       xs_ref, atts_ref, beta_ref, lng_ref, lnb_ref, mask_ref,
                       xnew_ref, xlocnew_ref, *, d):
    # source scores as a [1, N] row straight off the MXU (no XLU relayout)
    a_src = _mm(atts_ref[...], xs_ref[...], contract=(1, 1))          # [1, N]
    e = ad_ref[...] + a_src                                           # [TM, N]
    e = jnp.maximum(e, NEG_SLOPE * e) + bias_ref[...]   # leaky-relu, then edge mask
    m = jnp.max(e, axis=-1, keepdims=True)
    p = jnp.exp(e - m)
    s = jnp.sum(p, axis=-1, keepdims=True)
    # flash-style post-normalisation: one [TM, N] multiply saved
    gat = _mm(p, xs_ref[...]) * (pl.reciprocal(s, approx=True) * dmask_ref[...])
    xnew = jnp.maximum(gat + lin_ref[...], 0.0)
    beta = jax.nn.sigmoid(beta_ref[...])
    ln = _layernorm_masked(h_ref[...] * xnew, lng_ref[...], lnb_ref[...],
                           mask_ref[...], d)
    x_out = (1.0 - beta) * ln + beta * xnew
    xnew_ref[...] = x_out
    xlocnew_ref[...] = xloc_ref[...] + x_out


def _local_attn(adj_bias, dst_mask, a_dst, h, lin, x_local, xs, att_src_row,
                beta, ln_g, ln_b, mask, *, tm, dp, d):
    n = adj_bias.shape[0]
    out_shape = (jax.ShapeDtypeStruct((n, dp), jnp.float32),
                 jax.ShapeDtypeStruct((n, dp), jnp.float32))
    return pl.pallas_call(
        functools.partial(_local_attn_kernel, d=d),
        out_shape=out_shape,
        grid=(n // tm,),
        in_specs=[
            _row_spec(tm, n),                 # bf16 adjacency bias stripe
            _row_spec(tm, 1),                 # dst mask stripe
            _row_spec(tm, 1),                 # a_dst stripe
            _row_spec(tm, dp),                # relu(h) stripe
            _row_spec(tm, dp),                # lin stripe
            _row_spec(tm, dp),                # x_local stripe
            _resident(xs.shape),              # xs (full, bf16, stays resident)
            _resident(att_src_row.shape),
            _resident(beta.shape), _resident(ln_g.shape),
            _resident(ln_b.shape), _resident(mask.shape)],
        out_specs=(_row_spec(tm, dp), _row_spec(tm, dp)),
        compiler_params=_cparams("parallel"),
    )(adj_bias, dst_mask, a_dst, h, lin, x_local, xs, att_src_row, beta,
      ln_g, ln_b, mask)


# ----------------------------- global layer: proj + kv reduction -------------

def _global_proj_kernel(x_ref, fw_ref, fb_ref, mask_ref, ln2g_ref, ln2b_ref,
                        h_ref, k_ref, kv_ref, ksum_ref, *, dp, d, apply_pre_ln):
    @pl.when(pl.program_id(0) == 0)
    def _():
        kv_ref[...] = jnp.zeros_like(kv_ref)
        ksum_ref[...] = jnp.zeros_like(ksum_ref)

    xg = x_ref[...]
    if apply_pre_ln:      # fold Polynormer.ln (pre-GlobalAttn LayerNorm) in here
        xg = _layernorm_masked(xg, ln2g_ref[...], ln2b_ref[...], mask_ref[...], d)
    y = _mm(xg, fw_ref[...]) + fb_ref[...]                 # [TM, 3*Dp] = [h|k|v]
    h = y[:, :dp]
    k = jax.nn.sigmoid(y[:, dp:2 * dp]) * mask_ref[...]    # zero padded features
    v = y[:, 2 * dp:]
    h_ref[...] = h
    k_ref[...] = k
    # TODO(synk): check with pl.lower_as_mlir that this N-contraction streams
    #   into the MXU without an extra vxpose of k.
    kv_ref[...] += _mm(k, v, contract=(0, 0))              # [Dp, Dp]
    ksum_ref[...] += jnp.sum(k, axis=0, keepdims=True)     # [1, Dp]


def _global_proj(xg, fw, fb, mask, ln2_g, ln2_b, *, tm, dp, d, apply_pre_ln):
    n = xg.shape[0]
    out_shape = (jax.ShapeDtypeStruct((n, dp), jnp.float32),    # h
                 jax.ShapeDtypeStruct((n, dp), jnp.float32),    # k
                 jax.ShapeDtypeStruct((dp, dp), jnp.float32),   # kv
                 jax.ShapeDtypeStruct((1, dp), jnp.float32))    # k_sum
    return pl.pallas_call(
        functools.partial(_global_proj_kernel, dp=dp, d=d,
                          apply_pre_ln=apply_pre_ln),
        out_shape=out_shape,
        grid=(n // tm,),
        in_specs=[_row_spec(tm, dp), _resident(fw.shape), _resident(fb.shape),
                  _resident(mask.shape), _resident(ln2_g.shape),
                  _resident(ln2_b.shape)],
        out_specs=(_row_spec(tm, dp), _row_spec(tm, dp),
                   _resident((dp, dp)), _resident((1, dp))),
        compiler_params=_cparams("arbitrary"),   # kv/k_sum accumulate across steps
    )(xg, fw, fb, mask, ln2_g, ln2_b)


# ----------------------------- global layer: apply pass ----------------------

def _global_apply_kernel(h_ref, k_ref, kv_ref, ksum_ref, beta_ref, lng_ref,
                         lnb_ref, mask_ref, low_ref, lob_ref, xg_ref, *, d):
    k = k_ref[...]
    num = _mm(k, kv_ref[...])                                       # [TM, Dp]
    den = jnp.sum(k * ksum_ref[...], axis=-1, keepdims=True)        # [TM, 1]
    xg = num * pl.reciprocal(den, approx=True)
    beta = jax.nn.sigmoid(beta_ref[...])
    xg = _layernorm_masked(xg, lng_ref[...], lnb_ref[...], mask_ref[...], d) \
        * (h_ref[...] + beta)
    xg_ref[...] = jnp.maximum(_mm(xg, low_ref[...]) + lob_ref[...], 0.0)


def _global_apply(h, k, kv, ksum, beta, ln_g, ln_b, mask, lo_w, lo_b,
                  *, tm, dp, d):
    n = h.shape[0]
    return pl.pallas_call(
        functools.partial(_global_apply_kernel, d=d),
        out_shape=jax.ShapeDtypeStruct((n, dp), jnp.float32),
        grid=(n // tm,),
        in_specs=[_row_spec(tm, dp), _row_spec(tm, dp),
                  _resident(kv.shape), _resident(ksum.shape),
                  _resident(beta.shape), _resident(ln_g.shape),
                  _resident(ln_b.shape), _resident(mask.shape),
                  _resident(lo_w.shape), _resident(lo_b.shape)],
        out_specs=_row_spec(tm, dp),
        compiler_params=_cparams("parallel"),
    )(h, k, kv, ksum, beta, ln_g, ln_b, mask, lo_w, lo_b)


# ----------------------------- full forward ----------------------------------

def polynormer_forward(x_pad, adj_bias, dst_mask, prep, *, out_channels,
                       use_global, local_layers, global_layers, tm=None):
    n = x_pad.shape[0]
    d, dp, _, _ = prep["dims"]
    if tm is None:
        tm = _pick_tm(n)
    assert n % tm == 0, "node count must be a multiple of the row tile"
    mask = prep["ln_mask"]

    x = _linear(x_pad, prep["lin_in_W"], prep["lin_in_b"], tm)   # dropout = id
    x_local = jnp.zeros((n, dp), jnp.float32)
    for i in range(local_layers):
        xs, h, lin, a_dst = _local_proj(x, prep["loc_fW"][i], prep["loc_fb"][i],
                                        prep["att_dst"][i], tm=tm, dp=dp)
        x, x_local = _local_attn(adj_bias, dst_mask, a_dst, h, lin, x_local, xs,
                                 prep["att_src"][i], prep["betas"][i],
                                 prep["ln_g"][i], prep["ln_b"][i], mask,
                                 tm=tm, dp=dp, d=d)

    if not use_global:
        out = _linear(x_local, prep["pred_local_W"], prep["pred_local_b"], tm)
        return out[:, :out_channels]

    xg = x_local
    for i in range(global_layers):
        h, k, kv, ksum = _global_proj(xg, prep["glb_fW"][i], prep["glb_fb"][i],
                                      mask, prep["ln2_g"], prep["ln2_b"],
                                      tm=tm, dp=dp, d=d, apply_pre_ln=(i == 0))
        xg = _global_apply(h, k, kv, ksum, prep["g_betas"][i],
                           prep["g_ln_g"][i], prep["g_ln_b"][i], mask,
                           prep["lin_out_W"], prep["lin_out_b"],
                           tm=tm, dp=dp, d=d)
    out = _linear(xg, prep["pred_global_W"], prep["pred_global_b"], tm)
    return out[:, :out_channels]


# ----------------------------- parameter init & host-side prep ---------------

def init_raw_params(key, in_channels, hidden, out_channels, local_layers,
                    global_layers):
    """PyTorch-layout raw parameters (Linear weights as [out, in])."""
    D = hidden  # heads = 1
    state = {"key": key}

    def w(shape, scale=0.1):
        state["key"], sub = jax.random.split(state["key"])
        return (scale * jax.random.normal(sub, shape)).astype(jnp.float32)

    return {
        "lin_in_W": w((D, in_channels)), "lin_in_b": w((D,)),
        "hW": w((local_layers, D, D)), "hb": w((local_layers, D)),
        "gatW": w((local_layers, D, D)),
        "att_src": w((local_layers, D)), "att_dst": w((local_layers, D)),
        "linW": w((local_layers, D, D)), "linb": w((local_layers, D)),
        "ln_g": jnp.ones((local_layers, D), jnp.float32),
        "ln_b": jnp.zeros((local_layers, D), jnp.float32),
        "betas": jnp.zeros((local_layers, D), jnp.float32),
        "pred_local_W": w((out_channels, D)), "pred_local_b": w((out_channels,)),
        "ln2_g": jnp.ones((D,), jnp.float32), "ln2_b": jnp.zeros((D,), jnp.float32),
        "g_hW": w((global_layers, D, D)), "g_hb": w((global_layers, D)),
        "g_kW": w((global_layers, D, D)), "g_kb": w((global_layers, D)),
        "g_vW": w((global_layers, D, D)), "g_vb": w((global_layers, D)),
        "g_ln_g": jnp.ones((global_layers, D), jnp.float32),
        "g_ln_b": jnp.zeros((global_layers, D), jnp.float32),
        "g_betas": jnp.zeros((global_layers, D), jnp.float32),
        "lin_out_W": w((D, D)), "lin_out_b": w((D,)),
        "pred_global_W": w((out_channels, D)), "pred_global_b": w((out_channels,)),
    }


def prepare_params(raw, *, in_channels, hidden, out_channels, local_layers,
                   global_layers):
    """Host-side prep: transpose to [in, out], fuse per-layer projections,
    zero-pad every feature dim to a 128-lane multiple, cast weights to bf16."""
    D = hidden
    Dp = max(LANE, _pad_to(D))
    InP = max(LANE, _pad_to(in_channels))
    OutP = max(LANE, _pad_to(out_channels))

    def pad2(w_t, rows, cols):
        out = jnp.zeros((rows, cols), jnp.float32)
        return out.at[:w_t.shape[0], :w_t.shape[1]].set(w_t)

    def pad_row(v, cols):
        out = jnp.zeros((1, cols), jnp.float32)
        return out.at[0, :v.shape[0]].set(v)

    bf = lambda a: a.astype(jnp.bfloat16)
    prep = {"dims": (D, Dp, InP, OutP)}
    prep["lin_in_W"] = bf(pad2(raw["lin_in_W"].T, InP, Dp))
    prep["lin_in_b"] = pad_row(raw["lin_in_b"], Dp)
    prep["ln_mask"] = pad_row(jnp.ones((D,), jnp.float32), Dp)

    loc_fW, loc_fb, att_dst, att_src = [], [], [], []
    betas, ln_g, ln_b = [], [], []
    for i in range(local_layers):
        fw = jnp.zeros((Dp, 3 * Dp), jnp.float32)
        fw = fw.at[:D, 0:D].set(raw["hW"][i].T)
        fw = fw.at[:D, Dp:Dp + D].set(raw["gatW"][i].T)
        fw = fw.at[:D, 2 * Dp:2 * Dp + D].set(raw["linW"][i].T)
        loc_fW.append(bf(fw))
        fb = jnp.zeros((1, 3 * Dp), jnp.float32)
        fb = fb.at[0, 0:D].set(raw["hb"][i])
        fb = fb.at[0, 2 * Dp:2 * Dp + D].set(raw["linb"][i])  # GATConv bias=False
        loc_fb.append(fb)
        att_dst.append(bf(pad2(raw["att_dst"][i][:, None], Dp, 1)))
        att_src.append(bf(pad_row(raw["att_src"][i], Dp)))
        betas.append(pad_row(raw["betas"][i], Dp))
        ln_g.append(pad_row(raw["ln_g"][i], Dp))
        ln_b.append(pad_row(raw["ln_b"][i], Dp))
    prep.update(loc_fW=loc_fW, loc_fb=loc_fb, att_dst=att_dst, att_src=att_src,
                betas=betas, ln_g=ln_g, ln_b=ln_b)

    prep["pred_local_W"] = bf(pad2(raw["pred_local_W"].T, Dp, OutP))
    prep["pred_local_b"] = pad_row(raw["pred_local_b"], OutP)

    prep["ln2_g"] = pad_row(raw["ln2_g"], Dp)
    prep["ln2_b"] = pad_row(raw["ln2_b"], Dp)

    glb_fW, glb_fb, g_betas, g_ln_g, g_ln_b = [], [], [], [], []
    for i in range(global_layers):
        fw = jnp.zeros((Dp, 3 * Dp), jnp.float32)
        fw = fw.at[:D, 0:D].set(raw["g_hW"][i].T)
        fw = fw.at[:D, Dp:Dp + D].set(raw["g_kW"][i].T)
        fw = fw.at[:D, 2 * Dp:2 * Dp + D].set(raw["g_vW"][i].T)
        glb_fW.append(bf(fw))
        fb = jnp.zeros((1, 3 * Dp), jnp.float32)
        fb = fb.at[0, 0:D].set(raw["g_hb"][i])
        fb = fb.at[0, Dp:Dp + D].set(raw["g_kb"][i])
        fb = fb.at[0, 2 * Dp:2 * Dp + D].set(raw["g_vb"][i])
        glb_fb.append(fb)
        g_betas.append(pad_row(raw["g_betas"][i], Dp))
        g_ln_g.append(pad_row(raw["g_ln_g"][i], Dp))
        g_ln_b.append(pad_row(raw["g_ln_b"][i], Dp))
    prep.update(glb_fW=glb_fW, glb_fb=glb_fb, g_betas=g_betas,
                g_ln_g=g_ln_g, g_ln_b=g_ln_b)

    prep["lin_out_W"] = bf(pad2(raw["lin_out_W"].T, Dp, Dp))
    prep["lin_out_b"] = pad_row(raw["lin_out_b"], Dp)
    prep["pred_global_W"] = bf(pad2(raw["pred_global_W"].T, Dp, OutP))
    prep["pred_global_b"] = pad_row(raw["pred_global_b"], OutP)
    return prep


# ----------------------------- pure-JAX reference (unpadded, raw params) -----

def _reference(x_in, adj, raw, *, use_global, local_layers, global_layers):
    t = lambda W: W.T
    x = _mm(x_in, t(raw["lin_in_W"])) + raw["lin_in_b"]
    dst_mask = (jnp.sum(adj, -1, keepdims=True) > 0).astype(jnp.float32)
    x_local = jnp.zeros_like(x)
    for i in range(local_layers):
        h = jax.nn.relu(_mm(x, t(raw["hW"][i])) + raw["hb"][i])
        xs = _mm(x, t(raw["gatW"][i]))
        a_dst = jnp.sum(xs * raw["att_dst"][i], -1)
        a_src = jnp.sum(xs * raw["att_src"][i], -1)
        e = a_dst[:, None] + a_src[None, :]
        e = jnp.where(e > 0, e, NEG_SLOPE * e)
        e = jnp.where(adj > 0, e, MASK_VAL)
        p = jnp.exp(e - jnp.max(e, -1, keepdims=True))
        attn = p / jnp.sum(p, -1, keepdims=True)
        gat = _mm(attn, xs) * dst_mask
        lin = _mm(x, t(raw["linW"][i])) + raw["linb"][i]
        xnew = jax.nn.relu(gat + lin)
        beta = jax.nn.sigmoid(raw["betas"][i])[None, :]
        x = (1 - beta) * _layernorm(h * xnew, raw["ln_g"][i], raw["ln_b"][i]) \
            + beta * xnew
        x_local = x_local + x
    if not use_global:
        return _mm(x_local, t(raw["pred_local_W"])) + raw["pred_local_b"]

    xg = _layernorm(x_local, raw["ln2_g"], raw["ln2_b"])
    for i in range(global_layers):
        h = _mm(xg, t(raw["g_hW"][i])) + raw["g_hb"][i]
        k = jax.nn.sigmoid(_mm(xg, t(raw["g_kW"][i])) + raw["g_kb"][i])
        v = _mm(xg, t(raw["g_vW"][i])) + raw["g_vb"][i]
        kv = _mm(k, v, contract=(0, 0))
        num = _mm(k, kv)
        ksum = jnp.sum(k, 0, keepdims=True)
        den = jnp.sum(k * ksum, -1, keepdims=True)
        beta = jax.nn.sigmoid(raw["g_betas"][i])[None, :]
        xg = num / den
        xg = _layernorm(xg, raw["g_ln_g"][i], raw["g_ln_b"][i]) * (h + beta)
        xg = jax.nn.relu(_mm(xg, t(raw["lin_out_W"])) + raw["lin_out_b"])
    return _mm(xg, t(raw["pred_global_W"])) + raw["pred_global_b"]


# ----------------------------- driver -----------------------------------------

if __name__ == "__main__":
    N = 32            # number of graph nodes
    IN_CH = 24
    HIDDEN = 32       # hidden_channels (heads = 1)
    OUT_CH = 8
    L_LOCAL, L_GLOBAL = 3, 2
    TM = 16           # dst-row tile -> 2-step "parallel" grid at N = 32

    key = jax.random.PRNGKey(0)
    key, kx, kp = jax.random.split(key, 3)
    x = jax.random.normal(kx, (N, IN_CH), jnp.float32)

    # Deterministic edge_index (bidirectional ring + skip-3 edges), densified
    # to adj[dst, src] and converted to a bf16 additive softmax bias.
    src = jnp.arange(N)
    edge_src = jnp.concatenate([src, (src + 1) % N, src])
    edge_dst = jnp.concatenate([(src + 1) % N, src, (src + 3) % N])
    adj = jnp.zeros((N, N), jnp.float32).at[edge_dst, edge_src].set(1.0)
    adj_bias = jnp.where(adj > 0, 0.0, MASK_VAL).astype(jnp.bfloat16)
    dst_mask = (jnp.sum(adj, axis=-1, keepdims=True) > 0).astype(jnp.float32)

    raw = init_raw_params(kp, IN_CH, HIDDEN, OUT_CH, L_LOCAL, L_GLOBAL)
    prep = prepare_params(raw, in_channels=IN_CH, hidden=HIDDEN,
                          out_channels=OUT_CH, local_layers=L_LOCAL,
                          global_layers=L_GLOBAL)
    _, _, in_pad, _ = prep["dims"]
    x_pad = jnp.zeros((N, in_pad), jnp.float32).at[:, :IN_CH].set(x)

    # Default module state: self._global = False -> pred_local branch.
    out_local = polynormer_forward(x_pad, adj_bias, dst_mask, prep,
                                   out_channels=OUT_CH, use_global=False,
                                   local_layers=L_LOCAL, global_layers=L_GLOBAL,
                                   tm=TM)
    # Also exercise the GlobalAttn branch (self._global = True).
    out_global = polynormer_forward(x_pad, adj_bias, dst_mask, prep,
                                    out_channels=OUT_CH, use_global=True,
                                    local_layers=L_LOCAL, global_layers=L_GLOBAL,
                                    tm=TM)
    jax.block_until_ready((out_local, out_global))

    # Unpadded pure-JAX reference from raw params (same bf16 matmuls, exact
    # divisions) -- also catches any padding / tiling bugs.
    ref_local = _reference(x, adj, raw, use_global=False,
                           local_layers=L_LOCAL, global_layers=L_GLOBAL)
    ref_global = _reference(x, adj, raw, use_global=True,
                            local_layers=L_LOCAL, global_layers=L_GLOBAL)

    assert out_local.shape == (N, OUT_CH)
    assert out_global.shape == (N, OUT_CH)
    assert bool(jnp.all(jnp.isfinite(out_local)))
    assert bool(jnp.all(jnp.isfinite(out_global)))
    # Tolerance covers approx-reciprocal (EUP) + bf16 rounding differences.
    assert jnp.allclose(out_local, ref_local, atol=3e-2, rtol=3e-2)
    assert jnp.allclose(out_global, ref_global, atol=3e-2, rtol=3e-2)

    print("KERNEL_OK")
</pallas_src>

<mosaic_0001>
module attributes {stable_mosaic.version = 11 : i64} {
  func.func @_linear_kernel(%arg0: i32, %arg1: memref<16x128xf32, #tpu.memory_space<vmem>>, %arg2: memref<128x128xbf16, #tpu.memory_space<vmem>>, %arg3: memref<1x128xf32, #tpu.memory_space<vmem>>, %arg4: memref<16x128xf32, #tpu.memory_space<vmem>>) attributes {dimension_semantics = [#tpu.dimension_semantics<parallel>], iteration_bounds = array<i64: 2>, scalar_prefetch = 0 : i64, scratch_operands = 0 : i64, tpu.core_type = #tpu.core_type<tc>, window_params = [{transform_indices = @transform_0, window_bounds = array<i64: 16, 128>}, {pipeline_mode = #tpu.pipeline_mode<synchronous>, transform_indices = @transform_1, window_bounds = array<i64: 128, 128>}, {pipeline_mode = #tpu.pipeline_mode<synchronous>, transform_indices = @transform_2, window_bounds = array<i64: 1, 128>}, {transform_indices = @transform_3, window_bounds = array<i64: 16, 128>}]} {
    %c0 = arith.constant 0 : index
    %c0_0 = arith.constant 0 : index
    %0 = vector.load %arg1[%c0, %c0_0] : memref<16x128xf32, #tpu.memory_space<vmem>>, vector<16x128xf32>
    %c0_1 = arith.constant 0 : index
    %c0_2 = arith.constant 0 : index
    %1 = vector.load %arg2[%c0_1, %c0_2] : memref<128x128xbf16, #tpu.memory_space<vmem>>, vector<128x128xbf16>
    %2 = arith.truncf %0 : vector<16x128xf32> to vector<16x128xbf16>
    %cst = arith.constant dense<0.000000e+00> : vector<16x128xf32>
    %3 = tpu.matmul %2, %1, %cst {dimension_numbers = #tpu.dot_dimension_numbers<[1], [0], [0], [1], [0, 0, 1, 1], [], []>} : vector<16x128xbf16>, vector<128x128xbf16>, vector<16x128xf32> -> vector<16x128xf32>
    %c0_3 = arith.constant 0 : index
    %c0_4 = arith.constant 0 : index
    %4 = vector.load %arg3[%c0_3, %c0_4] : memref<1x128xf32, #tpu.memory_space<vmem>>, vector<1x128xf32>
    %5 = vector.broadcast %4 : vector<1x128xf32> to vector<16x128xf32>
    %6 = arith.addf %3, %5 : vector<16x128xf32>
    %c0_5 = arith.constant 0 : index
    %c0_6 = arith.constant 0 : index
    %7 = vector.load %arg4[%c0_5, %c0_6] : memref<16x128xf32, #tpu.memory_space<vmem>>, vector<16x128xf32>
    tpu.vector_store %arg4[%c0_5, %c0_6], %6 {strides = array<i32>} : memref<16x128xf32, #tpu.memory_space<vmem>>, vector<16x128xf32>,
    return
  }
  func.func @transform_0(%arg0: i32) -> (i32, i32) {
    %c0_i32 = arith.constant 0 : i32
    %c0_i32_0 = arith.constant 0 : i32
    return %arg0, %c0_i32 : i32, i32
  }
  func.func @transform_1(%arg0: i32) -> (i32, i32) {
    %c0_i32 = arith.constant 0 : i32
    %c0_i32_0 = arith.constant 0 : i32
    %c0_i32_1 = arith.constant 0 : i32
    return %c0_i32, %c0_i32_0 : i32, i32
  }
  func.func @transform_2(%arg0: i32) -> (i32, i32) {
    %c0_i32 = arith.constant 0 : i32
    %c0_i32_0 = arith.constant 0 : i32
    %c0_i32_1 = arith.constant 0 : i32
    return %c0_i32, %c0_i32_0 : i32, i32
  }
  func.func @transform_3(%arg0: i32) -> (i32, i32) {
    %c0_i32 = arith.constant 0 : i32
    %c0_i32_0 = arith.constant 0 : i32
    return %arg0, %c0_i32 : i32, i32
  }
}

</mosaic_0001>

<llo_original>
// kernel: tpu_custom_call.1
$region0: #{tpu_custom_call.1}
  #allocation0 [shape = 'u32[]', space=smem, size = 0x4, offset = 0x4, fixed_abs, tag = 'smem constant byte address 0x4 - core index']
  #allocation1 [shape = 'u32[144,128]{1,0:T(1,128)}', space=vmem, size = 0x12000, scoped, tag = 'internal scratch']
  %s0 = inlined_call_operand.hbm [shape: f32[32,128], index: 0, kind: input, shape index: {}]
  %s1 = inlined_call_operand.hbm [shape: bf16[128,128], index: 1, kind: input, shape index: {}]
  %s2 = inlined_call_operand.vmem [shape: f32[1,128], index: 2, kind: input, shape index: {}]
  %s3 = inlined_call_operand.hbm [shape: f32[32,128], index: 3, kind: output, shape index: {}]
  %s4 = sld [smem:[#allocation0]]
  $region53: #{tpu_custom_call.1} parent=0
    _
  %s6 = ssub.s32 1, %s4
  %s7 = scalar_select 0, %s6, %s4
  $region1: #{tpu_custom_call.1} parent=0
    #allocation2 [shape = 'u8[16384]{0}', space=vmem, size = 0x4000, scoped, tag = 'input window, operand 0']
    #allocation3 [shape = 's32[2]{0}', space=sflag, size = 0x8, scoped, tag = 'scoped memory for tpu_custom_call.1']
    #allocation4 [shape = 's32[2]{0}', space=sflag, size = 0x8, scoped, tag = 'scoped memory for tpu_custom_call.1']
    #allocation5 [shape = 'u8[32768]{0}', space=vmem, size = 0x8000, scoped, tag = 'input window, operand 1, single buffered']
    #allocation6 [shape = 's32[1]{0}', space=sflag, size = 0x4, scoped, tag = 'scoped memory for tpu_custom_call.1']
    #allocation7 [shape = 'u8[16384]{0}', space=vmem, size = 0x4000, scoped, tag = 'output window, operand 0']
    %8 = vsyncpa [#allocation3], 0
    %s9 = scalar_lea.sflag [#allocation3], 1
    %10 = vsyncpa %s9, 0
    %11 = vsyncpa [#allocation6], 0
    %12 = vsyncpa [#allocation4], 0
    %s13 = scalar_lea.sflag [#allocation4], 1
    %14 = vsyncpa %s13, 0
    loop: start=0, step=1, limit=4
    $region2: #{tpu_custom_call.1} parent=1 // loop_pre_header
      _
    $region3: #{tpu_custom_call.1} parent=1 // loop_header
      %s16 = sphi 0, %s20
      %p17 = scmp.ge.s32.totalorder %s16, 4
      %s26 = sphi 0, %s28
      %s29 = sphi 0, %s26
      %s30 = sphi 0, %s29
      %s46 = sphi 0, %s30
      %s50 = sphi 0, %s50
      %s52 = sphi 0, %s50
      %s53 = sphi 0, %s52
      %s67 = sphi 0, %s53
      %s71 = sphi 0, %s71
      %s73 = sphi 0, %s71
      %s74 = sphi 0, %s73
      %s88 = sphi 0, %s74
      %s94 = sphi 0, %s96
      %s97 = sphi 0, %s94
      %s98 = sphi 0, %s97
      %s114 = sphi 0, %s98
    $region4: #{tpu_custom_call.1} parent=1 // loop_header_branch
      %19 = sbr.rel (%p17) target = $region8
    $region5: #{tpu_custom_call.1} parent=1 // loop_body
      %s21 = ssub.s32 %s16, 1
      %s22 = ssub.s32 %s16, 2
      %s23 = sadd.s32 %s16, 1
      %s24 = ssub.s32 %s16, %s23
      %p25 = scmp.eq.s32.totalorder %s24, 0
      %s27 = sadd.s32 %s26, 1
      %s28 = scalar_select %p25, %s26, %s27
      %p31 = pneg %p25
      %p32 = scmp.eq.s32.totalorder %s16, 1
      %p33 = por %p31, %p32
      %p34 = scmp.ne.s32.totalorder %s26, %s29
      %p35 = scmp.eq.s32.totalorder %s16, 0
      %p36 = por %p34, %p35
      %p37 = scmp.ne.s32.totalorder %s26, %s29
      %p38 = scmp.eq.s32.totalorder %s21, 1
      %p39 = por %p37, %p38
      %p40 = scmp.ne.s32.totalorder %s29, %s30
      %p41 = scmp.eq.s32.totalorder %s21, 0
      %p42 = por %p40, %p41
      %p43 = scmp.ne.s32.totalorder %s29, %s30
      %p44 = scmp.eq.s32.totalorder %s22, 1
      %p45 = por %p43, %p44
      %p47 = scmp.ne.s32.totalorder %s30, %s46
      %p48 = scmp.eq.s32.totalorder %s22, 0
      %p49 = por %p47, %p48
      %s51 = sadd.s32 %s50, 1
      %p54 = scmp.eq.s32.totalorder %s16, 1
      %p55 = scmp.ne.s32.totalorder %s50, %s52
      %p56 = scmp.eq.s32.totalorder %s16, 0
      %p57 = por %p55, %p56
      %p58 = scmp.ne.s32.totalorder %s50, %s52
      %p59 = scmp.eq.s32.totalorder %s21, 1
      %p60 = por %p58, %p59
      %p61 = scmp.ne.s32.totalorder %s52, %s53
      %p62 = scmp.eq.s32.totalorder %s21, 0
      %p63 = por %p61, %p62
      %p64 = scmp.ne.s32.totalorder %s52, %s53
      %p65 = scmp.eq.s32.totalorder %s22, 1
      %p66 = por %p64, %p65
      %p68 = scmp.ne.s32.totalorder %s53, %s67
      %p69 = scmp.eq.s32.totalorder %s22, 0
      %p70 = por %p68, %p69
      %s72 = sadd.s32 %s71, 1
      %p75 = scmp.eq.s32.totalorder %s16, 1
      %p76 = scmp.ne.s32.totalorder %s71, %s73
      %p77 = scmp.eq.s32.totalorder %s16, 0
      %p78 = por %p76, %p77
      %p79 = scmp.ne.s32.totalorder %s71, %s73
      %p80 = scmp.eq.s32.totalorder %s21, 1
      %p81 = por %p79, %p80
      %p82 = scmp.ne.s32.totalorder %s73, %s74
      %p83 = scmp.eq.s32.totalorder %s21, 0
      %p84 = por %p82, %p83
      %p85 = scmp.ne.s32.totalorder %s73, %s74
      %p86 = scmp.eq.s32.totalorder %s22, 1
      %p87 = por %p85, %p86
      %p89 = scmp.ne.s32.totalorder %s74, %s88
      %p90 = scmp.eq.s32.totalorder %s22, 0
      %p91 = por %p89, %p90
      %s92 = ssub.s32 %s16, %s23
      %p93 = scmp.eq.s32.totalorder %s92, 0
      %s95 = sadd.s32 %s94, 1
      %s96 = scalar_select %p93, %s94, %s95
      %p99 = pneg %p93
      %p100 = scmp.eq.s32.totalorder %s16, 1
      %p101 = por %p99, %p100
      %p102 = scmp.ne.s32.totalorder %s94, %s97
      %p103 = scmp.eq.s32.totalorder %s16, 0
      %p104 = por %p102, %p103
      %p105 = scmp.ne.s32.totalorder %s94, %s97
      %p106 = scmp.eq.s32.totalorder %s21, 1
      %p107 = por %p105, %p106
      %p108 = scmp.ne.s32.totalorder %s97, %s98
      %p109 = scmp.eq.s32.totalorder %s21, 0
      %p110 = por %p108, %p109
      %p111 = scmp.ne.s32.totalorder %s97, %s98
      %p112 = scmp.eq.s32.totalorder %s22, 1
      %p113 = por %p111, %p112
      %p115 = scmp.ne.s32.totalorder %s98, %s114
      %p116 = scmp.eq.s32.totalorder %s22, 0
      %p117 = por %p115, %p116
      %p118 = scmp.le.s32.totalorder 1, %s16
      %p119 = scmp.lt.s32.totalorder %s16, 3
      %p120 = pnand %p118, %p119
      %p121 = pneg %p120
      // Predicated region
      $region9: #{tpu_custom_call.1} parent=5 // pred_check
        _
      $region10: #{tpu_custom_call.1} parent=5 // pred_check_branch
        %123 = sbr.rel (%p120) target = $region12
      $region11: #{tpu_custom_call.1} parent=5 // pred_region
        %s124 = ssub.s32 %s16, 1
        // Predicated region
        $region13: #{tpu_custom_call.1} parent=11 // pred_check
          %p125 = pneg %p63
        $region14: #{tpu_custom_call.1} parent=11 // pred_check_branch
          %127 = sbr.rel (%p125) target = $region16
        $region15: #{tpu_custom_call.1} parent=11 // pred_region
          %s129 = ssub.s32 1024, 1024
          %130 = vsyncadd [#allocation6], %s129
          %s131 = sshll.u32 [#allocation5], 4
          %s132 = int_to_ptr.vmem [resolvable:$true] %s131
          %137 = dma.hbm_to_vmem [thread:$0]  %s1, 1024, %s132, [#allocation6], 64, 64, 4
        $region16: #{tpu_custom_call.1} parent=11 // pred_fallthru
          _
        // Predicated region
        $region17: #{tpu_custom_call.1} parent=11 // pred_check
          %p138 = pneg %p84
        $region18: #{tpu_custom_call.1} parent=11 // pred_check_branch
          %140 = sbr.rel (%p138) target = $region20
        $region19: #{tpu_custom_call.1} parent=11 // pred_region
          _
        $region20: #{tpu_custom_call.1} parent=11 // pred_fallthru
          _
      $region12: #{tpu_custom_call.1} parent=5 // pred_fallthru
        _
      %p141 = scmp.lt.s32.totalorder %s16, 2
      // Predicated region
      $region21: #{tpu_custom_call.1} parent=5 // pred_check
        %p142 = pneg %p141
      $region22: #{tpu_custom_call.1} parent=5 // pred_check_branch
        %144 = sbr.rel (%p142) target = $region24
      $region23: #{tpu_custom_call.1} parent=5 // pred_region
        // Predicated region
        $region25: #{tpu_custom_call.1} parent=23 // pred_check
          %p145 = pneg %p36
        $region26: #{tpu_custom_call.1} parent=23 // pred_check_branch
          %147 = sbr.rel (%p145) target = $region28
        $region27: #{tpu_custom_call.1} parent=23 // pred_region
          %s148 = sand.u32 %s26, 1
          %s149 = scalar_lea.sflag [#allocation3], %s148
          %s150 = sand.u32 %s26, 1
          %s151 = smul.addr %s150, 16
          %s152 = scalar_lea.vmem [#allocation2], %s151
          %s153 = smul.u32 2, %s16
          %s155 = ssub.s32 256, 256
          %156 = vsyncadd %s149, %s155
          %s157 = smul.addr %s153, 128
          %s158 = scalar_lea.hbm %s0, %s157
          %s159 = sshll.u32 %s152, 4
          %s160 = int_to_ptr.vmem [resolvable:$true] %s159
          %165 = dma.hbm_to_vmem [thread:$0]  %s158, 256, %s160, %s149, 128, 128, 8
        $region28: #{tpu_custom_call.1} parent=23 // pred_fallthru
          _
      $region24: #{tpu_custom_call.1} parent=5 // pred_fallthru
        _
      %p166 = scmp.le.s32.totalorder 1, %s16
      %p167 = scmp.lt.s32.totalorder %s16, 3
      %p168 = pnand %p166, %p167
      %p169 = pneg %p168
      // Predicated region
      $region29: #{tpu_custom_call.1} parent=5 // pred_check
        _
      $region30: #{tpu_custom_call.1} parent=5 // pred_check_branch
        %171 = sbr.rel (%p168) target = $region32
      $region31: #{tpu_custom_call.1} parent=5 // pred_region
        %s172 = ssub.s32 %s16, 1
        %s173 = sand.u32 %s29, 1
        %s174 = scalar_lea.sflag [#allocation3], %s173
        %s175 = sand.u32 %s29, 1
        %s176 = smul.addr %s175, 16
        %s177 = scalar_lea.vmem [#allocation2], %s176
        // Predicated region
        $region33: #{tpu_custom_call.1} parent=31 // pred_check
          %p178 = pneg %p42
        $region34: #{tpu_custom_call.1} parent=31 // pred_check_branch
          %180 = sbr.rel (%p178) target = $region36
        $region35: #{tpu_custom_call.1} parent=31 // pred_region
          %181 = dma.done %s174, 256
        $region36: #{tpu_custom_call.1} parent=31 // pred_fallthru
          _
        // Predicated region
        $region37: #{tpu_custom_call.1} parent=31 // pred_check
          %p182 = pneg %p63
        $region38: #{tpu_custom_call.1} parent=31 // pred_check_branch
          %184 = sbr.rel (%p182) target = $region40
        $region39: #{tpu_custom_call.1} parent=31 // pred_region
          %185 = dma.done [#allocation6], 1024
        $region40: #{tpu_custom_call.1} parent=31 // pred_fallthru
          _
        %s186 = sand.u32 %s29, 1
        %s187 = scalar_lea.sflag [#allocation3], %s186
        %s188 = sand.u32 %s29, 1
        %s189 = smul.addr %s188, 16
        %s190 = scalar_lea.vmem [#allocation2], %s189
        %p191 = pneg %p42
        %p192 = pneg %p39
        %p193 = pneg %p63
        %p194 = pneg %p60
        %p195 = pneg %p84
        %p196 = pneg %p81
        %p197 = pneg %p110
        %p198 = pneg %p107
        %s199 = sand.u32 %s97, 1
        %s200 = scalar_lea.sflag [#allocation4], %s199
        %s201 = sand.u32 %s97, 1
        %s202 = smul.addr %s201, 16
        %s203 = scalar_lea.vmem [#allocation7], %s202
        %s204 = smul.u32 2, %s21
        %s205 = smul.u32 2, %s21
        %v207 = vld [vmem:[%s177] sm:$0xff]
        %v208 = vld [vmem:[%s177 + $0x8] sm:$0xff]
        %v209 = vld [vmem:[#allocation5] sm:$0xf]
        %v210 = vld [vmem:[#allocation5 + $0x4] sm:$0xf]
        %v211 = vld [vmem:[#allocation5 + $0x8] sm:$0xf]
        %v212 = vld [vmem:[#allocation5 + $0xc] sm:$0xf]
        %v213 = vld [vmem:[#allocation5 + $0x10] sm:$0xf]
        %v214 = vld [vmem:[#allocation5 + $0x14] sm:$0xf]
        %v215 = vld [vmem:[#allocation5 + $0x18] sm:$0xf]
        %v216 = vld [vmem:[#allocation5 + $0x1c] sm:$0xf]
        %v217 = vld [vmem:[#allocation5 + $0x20] sm:$0xf]
        %v218 = vld [vmem:[#allocation5 + $0x24] sm:$0xf]
        %v219 = vld [vmem:[#allocation5 + $0x28] sm:$0xf]
        %v220 = vld [vmem:[#allocation5 + $0x2c] sm:$0xf]
        %v221 = vld [vmem:[#allocation5 + $0x30] sm:$0xf]
        %v222 = vld [vmem:[#allocation5 + $0x34] sm:$0xf]
        %v223 = vld [vmem:[#allocation5 + $0x38] sm:$0xf]
        %v224 = vld [vmem:[#allocation5 + $0x3c] sm:$0xf]
        %v225 = vpack.c.bf16 %v208, %v207
        %v226 = vld [vmem:[%s2] sm:$0x1]
        %v228 = vlaneseq
        %v229 = vshrl.u32 %v228, 7
        %v230 = vsub.s32 0, %v229
        %v231 = vrot.slane %v226, %v230
        %v249 = vunpack.c.l.b16 %v209
        %v250 = vunpack.c.l.b16 %v210
        %v251 = vunpack.c.l.b16 %v211
        %v252 = vunpack.c.l.b16 %v212
        %v253 = vunpack.c.l.b16 %v213
        %v254 = vunpack.c.l.b16 %v214
        %v255 = vunpack.c.l.b16 %v215
        %v256 = vunpack.c.l.b16 %v216
        %v257 = vunpack.c.l.b16 %v217
        %v258 = vunpack.c.l.b16 %v218
        %v259 = vunpack.c.l.b16 %v219
        %v260 = vunpack.c.l.b16 %v220
        %v261 = vunpack.c.l.b16 %v221
        %v262 = vunpack.c.l.b16 %v222
        %v263 = vunpack.c.l.b16 %v223
        %v264 = vunpack.c.l.b16 %v224
        %v265 = vpack.c.b16 %v250, %v249
        %v266 = vpack.c.b16 %v252, %v251
        %v267 = vpack.c.b16 %v254, %v253
        %v268 = vpack.c.b16 %v256, %v255
        %v269 = vpack.c.b16 %v258, %v257
        %v270 = vpack.c.b16 %v260, %v259
        %v271 = vpack.c.b16 %v262, %v261
        %v272 = vpack.c.b16 %v264, %v263
        %281 = vmatprep.subr.bf16.mxu0 0
        %282 = vmatpush1.bf16.msra.mxu0 %v265
        %283 = vmatprep.subr.bf16.mxu0 0
        %284 = vmatpush1.bf16.msra.mxu0 %v266
        %285 = vmatprep.subr.bf16.mxu0 0
        %286 = vmatpush1.bf16.msra.mxu0 %v267
        %287 = vmatprep.subr.bf16.mxu0 0
        %288 = vmatpush1.bf16.msra.mxu0 %v268
        %289 = vmatprep.subr.bf16.mxu0 0
        %290 = vmatpush1.bf16.msra.mxu0 %v269
        %291 = vmatprep.subr.bf16.mxu0 0
        %292 = vmatpush1.bf16.msra.mxu0 %v270
        %293 = vmatprep.subr.bf16.mxu0 0
        %294 = vmatpush1.bf16.msra.mxu0 %v271
        %295 = vmatprep.subr.bf16.mxu0 0
        %296 = vmatpush1.bf16.msra.mxu0 %v272
        %297 = vmatprep.subr.bf16.mxu0 0
        %298 = vmatpush1.bf16.msra.mxu0 0
        %299 = vmatprep.subr.bf16.mxu0 0
        %300 = vmatpush1.bf16.msra.mxu0 0
        %301 = vmatprep.subr.bf16.mxu0 0
        %302 = vmatpush1.bf16.msra.mxu0 0
        %303 = vmatprep.subr.bf16.mxu0 0
        %304 = vmatpush1.bf16.msra.mxu0 0
        %305 = vmatprep.subr.bf16.mxu0 0
        %306 = vmatpush1.bf16.msra.mxu0 0
        %307 = vmatprep.subr.bf16.mxu0 0
        %308 = vmatpush1.bf16.msra.mxu0 0
        %309 = vmatprep.subr.bf16.mxu0 0
        %310 = vmatpush1.bf16.msra.mxu0 0
        %311 = vmatprep.subr.bf16.mxu0 0
        %312 = vmatpush1.bf16.msra.mxu0 0
        %313 = vmatprep.mubr.bf16.mxu0 0
        %314 = vmatmul.mubr.bf16.gmra.mrb[0].mxu0 %v225
        %v315 = vpop.f32.mrb[0].mxu0
        %v316 = vadd.f32 %v231, %v315
        %v317 = vpop.f32.mrb[0].mxu0
        %v318 = vpop.f32.mrb[0].mxu0
        %v319 = vadd.f32 %v231, %v318
        %v320 = vpop.f32.mrb[0].mxu0
        %321 = vdwg.mxu0
        %322 = vst [vmem:[%s203] sm:$0xff] %v316
        %323 = vst [vmem:[%s203 + $0x8] sm:$0xff] %v319
        %s324 = sand.u32 %s97, 1
        %s325 = scalar_lea.sflag [#allocation4], %s324
        %s326 = sand.u32 %s97, 1
        %s327 = smul.addr %s326, 16
        %s328 = scalar_lea.vmem [#allocation7], %s327
        // Predicated region
        $region41: #{tpu_custom_call.1} parent=31 // pred_check
          %p329 = pneg %p107
        $region42: #{tpu_custom_call.1} parent=31 // pred_check_branch
          %331 = sbr.rel (%p329) target = $region44
        $region43: #{tpu_custom_call.1} parent=31 // pred_region
          %s332 = smul.u32 2, %s21
          %s334 = ssub.s32 256, 256
          %335 = vsyncadd %s325, %s334
          %s336 = smul.addr %s332, 128
          %s337 = scalar_lea.hbm %s3, %s336
          %s338 = sshll.u32 %s328, 4
          %s339 = int_to_ptr.vmem [resolvable:$true] %s338
          %344 = dma.vmem_to_hbm [thread:$0]  %s339, 256, %s337, %s325, 128, 128, 8
        $region44: #{tpu_custom_call.1} parent=31 // pred_fallthru
          _
      $region32: #{tpu_custom_call.1} parent=5 // pred_fallthru
        _
      %p345 = scmp.le.s32.totalorder 2, %s16
      // Predicated region
      $region45: #{tpu_custom_call.1} parent=5 // pred_check
        %p346 = pneg %p345
      $region46: #{tpu_custom_call.1} parent=5 // pred_check_branch
        %348 = sbr.rel (%p346) target = $region48
      $region47: #{tpu_custom_call.1} parent=5 // pred_region
        %s349 = ssub.s32 %s16, 2
        // Predicated region
        $region49: #{tpu_custom_call.1} parent=47 // pred_check
          %p350 = pneg %p113
        $region50: #{tpu_custom_call.1} parent=47 // pred_check_branch
          %352 = sbr.rel (%p350) target = $region52
        $region51: #{tpu_custom_call.1} parent=47 // pred_region
          %s353 = sand.u32 %s98, 1
          %s354 = scalar_lea.sflag [#allocation4], %s353
          %s355 = sand.u32 %s98, 1
          %s356 = smul.addr %s355, 16
          %s357 = scalar_lea.vmem [#allocation7], %s356
          %358 = dma.done %s354, 256
        $region52: #{tpu_custom_call.1} parent=47 // pred_fallthru
          _
      $region48: #{tpu_custom_call.1} parent=5 // pred_fallthru
        _
    $region6: #{tpu_custom_call.1} parent=1 // loop_footer
      %s20 = sadd.s32 1, %s16
    $region7: #{tpu_custom_call.1} parent=1 // loop_footer_branch
      %15 = sbr.rel target = $region3
    $region8: #{tpu_custom_call.1} parent=1 // loop_exit
      _
    %359 = vsyncpa [#allocation3], 1
    %s360 = scalar_lea.sflag [#allocation3], 1
    %361 = vsyncpa %s360, 1
    %362 = vsyncpa [#allocation6], 1
    %363 = vsyncpa [#allocation4], 1
    %s364 = scalar_lea.sflag [#allocation4], 1
    %365 = vsyncpa %s364, 1

</llo_original>
